<compile_context>
chip_gen: v7x
topology: tpu7x:2x2x1
jax: 0.10.0
libtpu: 0.0.40
codegen_flags: <defaults>
</compile_context>

<pallas_src>
import functools

import jax
import jax.numpy as jnp
from jax.experimental import pallas as pl
from jax.experimental.pallas import tpu as pltpu


def _round_up(n, m):
    return ((n + m - 1) // m) * m


def _cdiv(a, b):
    return (a + b - 1) // b


def agentnet_kernel(x_ref, w1_ref, b1_ref, w2_ref, b2_ref, o_ref):
    # x tile arrives f32 from HBM; cast to bf16 in VMEM for the MXU.
    x = x_ref[...].astype(w1_ref.dtype)
    h = jnp.dot(x, w1_ref[...], preferred_element_type=jnp.float32) + b1_ref[...]
    h = jnp.maximum(h, 0.0)                                     # ReLU in f32
    y = (
        jnp.dot(h.astype(w2_ref.dtype), w2_ref[...],
                preferred_element_type=jnp.float32)
        + b2_ref[...]
    )
    o_ref[...] = y.astype(o_ref.dtype)


def prepare_params(w1, b1, w2, b2, *, compute_dtype=jnp.bfloat16):
    """One-time parameter prep, hoisted out of the per-call hot path.

    w1: (D_in, H), b1: (H,) or (1, H), w2: (H, D_out), b2: (D_out,) or (1, D_out).
    """
    w1p = jnp.asarray(w1, compute_dtype)
    w2p = jnp.asarray(w2, compute_dtype)
    b1p = jnp.asarray(b1, jnp.float32).reshape(1, -1)
    b2p = jnp.asarray(b2, jnp.float32).reshape(1, -1)
    return w1p, b1p, w2p, b2p


def _choose_batch_tile(B, max_tb):
    # Enough steps so each tile fits under max_tb, and >=2 steps whenever the
    # batch can be split into two >=16-row tiles (v7x megacore utilization).
    # Balancing the tile size across the needed steps bounds batch-padding
    # waste to <16 rows per step.
    n_steps = max(_cdiv(B, max_tb), 2 if B > 16 else 1)
    tb = _round_up(_cdiv(B, n_steps), 16)
    b_pad = _round_up(B, tb)
    return tb, b_pad


@functools.partial(jax.jit, static_argnames=("max_tb",))
def agentnet_forward(x, params, *, max_tb=2048):
    """x: (B, D_in) f32; params: output of prepare_params()."""
    w1, b1, w2, b2 = params
    B, d_in = x.shape
    d_h = w1.shape[1]
    d_out = w2.shape[1]

    tb, b_pad = _choose_batch_tile(B, max_tb)
    x_p = x if b_pad == B else jnp.pad(x, ((0, b_pad - B), (0, 0)))

    grid = (b_pad // tb,)

    # VMEM budget: double-buffered x/out tiles + resident weights/biases, with
    # 2x margin, clamped so we keep headroom under v7x's 64 MiB VMEM.
    vmem_need = (
        2 * tb * (d_in + d_out) * 4
        + (d_in * d_h + d_h * d_out) * jnp.dtype(w1.dtype).itemsize
        + (d_h + d_out) * 4
    )
    vmem_limit = min(max(2 * vmem_need, 32 * 1024 * 1024), 48 * 1024 * 1024)

    out_p = pl.pallas_call(
        agentnet_kernel,
        out_shape=jax.ShapeDtypeStruct((b_pad, d_out), jnp.float32),
        grid_spec=pltpu.PrefetchScalarGridSpec(
            num_scalar_prefetch=0,
            grid=grid,
            in_specs=[
                # x: batch-tiled, full (unpadded) feature dim; streamed and
                # double-buffered by the BlockSpec pipeline.
                pl.BlockSpec((tb, d_in), lambda i: (i, 0)),
                # Params: constant index_map -> loaded once, VMEM-resident.
                pl.BlockSpec((d_in, d_h), lambda i: (0, 0)),
                pl.BlockSpec((1, d_h), lambda i: (0, 0)),
                pl.BlockSpec((d_h, d_out), lambda i: (0, 0)),
                pl.BlockSpec((1, d_out), lambda i: (0, 0)),
            ],
            out_specs=pl.BlockSpec((tb, d_out), lambda i: (i, 0)),
        ),
        compiler_params=pltpu.CompilerParams(
            # Independent batch tiles -> sharded across both TCs on v7x.
            dimension_semantics=("parallel",),
            vmem_limit_bytes=vmem_limit,
        ),
    )(x_p, w1, b1, w2, b2)

    return out_p if b_pad == B else out_p[:B]


if __name__ == "__main__":
    input_dim, hidden_dim, output_dim = 16, 32, 8
    batch = 2

    key = jax.random.PRNGKey(0)
    kx, k1, k2, k3, k4 = jax.random.split(key, 5)
    x = jax.random.normal(kx, (batch, input_dim), jnp.float32)

    # Deterministic init mimicking nn.Linear's uniform(-1/sqrt(fan_in), ...).
    lim1 = 1.0 / (input_dim ** 0.5)
    lim2 = 1.0 / (hidden_dim ** 0.5)
    w1 = jax.random.uniform(k1, (input_dim, hidden_dim), jnp.float32, -lim1, lim1)
    b1 = jax.random.uniform(k2, (hidden_dim,), jnp.float32, -lim1, lim1)
    w2 = jax.random.uniform(k3, (hidden_dim, output_dim), jnp.float32, -lim2, lim2)
    b2 = jax.random.uniform(k4, (output_dim,), jnp.float32, -lim2, lim2)

    # One-time parameter prep (cast/reshape), reused across forward calls.
    params = prepare_params(w1, b1, w2, b2)

    out = agentnet_forward(x, params)
    jax.block_until_ready(out)

    # Pure-JAX reference replicating the kernel's bf16-input / f32-accumulate
    # numerics (biases, bias-add and ReLU stay f32, same as inside the kernel).
    xb = x.astype(jnp.bfloat16).astype(jnp.float32)
    w1b = w1.astype(jnp.bfloat16).astype(jnp.float32)
    w2b = w2.astype(jnp.bfloat16).astype(jnp.float32)
    h = jnp.maximum(xb @ w1b + b1[None, :], 0.0)
    ref = h.astype(jnp.bfloat16).astype(jnp.float32) @ w2b + b2[None, :]

    assert out.shape == (batch, output_dim), out.shape
    assert out.dtype == jnp.float32
    assert jnp.allclose(out, ref, atol=1e-3, rtol=1e-3)

    print("KERNEL_OK")
</pallas_src>

<mosaic_0001>
module attributes {stable_mosaic.version = 11 : i64} {
  func.func @agentnet_kernel(%arg0: i32, %arg1: memref<16x16xf32, #tpu.memory_space<vmem>>, %arg2: memref<16x32xbf16, #tpu.memory_space<vmem>>, %arg3: memref<1x32xf32, #tpu.memory_space<vmem>>, %arg4: memref<32x8xbf16, #tpu.memory_space<vmem>>, %arg5: memref<1x8xf32, #tpu.memory_space<vmem>>, %arg6: memref<16x8xf32, #tpu.memory_space<vmem>>) attributes {dimension_semantics = [#tpu.dimension_semantics<parallel>], iteration_bounds = array<i64: 1>, scalar_prefetch = 0 : i64, scratch_operands = 0 : i64, tpu.core_type = #tpu.core_type<tc>, window_params = [{transform_indices = @transform_0, window_bounds = array<i64: 16, 16>}, {pipeline_mode = #tpu.pipeline_mode<synchronous>, transform_indices = @transform_1, window_bounds = array<i64: 16, 32>}, {pipeline_mode = #tpu.pipeline_mode<synchronous>, transform_indices = @transform_2, window_bounds = array<i64: 1, 32>}, {pipeline_mode = #tpu.pipeline_mode<synchronous>, transform_indices = @transform_3, window_bounds = array<i64: 32, 8>}, {pipeline_mode = #tpu.pipeline_mode<synchronous>, transform_indices = @transform_4, window_bounds = array<i64: 1, 8>}, {transform_indices = @transform_5, window_bounds = array<i64: 16, 8>}]} {
    %c0 = arith.constant 0 : index
    %c0_0 = arith.constant 0 : index
    %0 = vector.load %arg1[%c0, %c0_0] : memref<16x16xf32, #tpu.memory_space<vmem>>, vector<16x16xf32>
    %1 = arith.truncf %0 : vector<16x16xf32> to vector<16x16xbf16>
    %c0_1 = arith.constant 0 : index
    %c0_2 = arith.constant 0 : index
    %2 = vector.load %arg2[%c0_1, %c0_2] : memref<16x32xbf16, #tpu.memory_space<vmem>>, vector<16x32xbf16>
    %cst = arith.constant dense<0.000000e+00> : vector<16x32xf32>
    %3 = tpu.matmul %1, %2, %cst {dimension_numbers = #tpu.dot_dimension_numbers<[1], [0], [0], [1], [0, 0, 1, 1], [], []>} : vector<16x16xbf16>, vector<16x32xbf16>, vector<16x32xf32> -> vector<16x32xf32>
    %c0_3 = arith.constant 0 : index
    %c0_4 = arith.constant 0 : index
    %4 = vector.load %arg3[%c0_3, %c0_4] : memref<1x32xf32, #tpu.memory_space<vmem>>, vector<1x32xf32>
    %5 = vector.broadcast %4 : vector<1x32xf32> to vector<16x32xf32>
    %6 = arith.addf %3, %5 : vector<16x32xf32>
    %cst_5 = arith.constant 0.000000e+00 : f32
    %7 = vector.broadcast %cst_5 : f32 to vector<16x32xf32>
    %8 = arith.maximumf %6, %7 : vector<16x32xf32>
    %9 = arith.truncf %8 : vector<16x32xf32> to vector<16x32xbf16>
    %c0_6 = arith.constant 0 : index
    %c0_7 = arith.constant 0 : index
    %10 = vector.load %arg4[%c0_6, %c0_7] : memref<32x8xbf16, #tpu.memory_space<vmem>>, vector<32x8xbf16>
    %cst_8 = arith.constant dense<0.000000e+00> : vector<16x8xf32>
    %11 = tpu.matmul %9, %10, %cst_8 {dimension_numbers = #tpu.dot_dimension_numbers<[1], [0], [0], [1], [0, 0, 1, 1], [], []>} : vector<16x32xbf16>, vector<32x8xbf16>, vector<16x8xf32> -> vector<16x8xf32>
    %c0_9 = arith.constant 0 : index
    %c0_10 = arith.constant 0 : index
    %12 = vector.load %arg5[%c0_9, %c0_10] : memref<1x8xf32, #tpu.memory_space<vmem>>, vector<1x8xf32>
    %13 = vector.broadcast %12 : vector<1x8xf32> to vector<16x8xf32>
    %14 = arith.addf %11, %13 : vector<16x8xf32>
    %c0_11 = arith.constant 0 : index
    %c0_12 = arith.constant 0 : index
    %15 = vector.load %arg6[%c0_11, %c0_12] : memref<16x8xf32, #tpu.memory_space<vmem>>, vector<16x8xf32>
    tpu.vector_store %arg6[%c0_11, %c0_12], %14 {strides = array<i32>} : memref<16x8xf32, #tpu.memory_space<vmem>>, vector<16x8xf32>,
    return
  }
  func.func @transform_0(%arg0: i32) -> (i32, i32) {
    %c0_i32 = arith.constant 0 : i32
    %c0_i32_0 = arith.constant 0 : i32
    return %arg0, %c0_i32 : i32, i32
  }
  func.func @transform_1(%arg0: i32) -> (i32, i32) {
    %c0_i32 = arith.constant 0 : i32
    %c0_i32_0 = arith.constant 0 : i32
    %c0_i32_1 = arith.constant 0 : i32
    return %c0_i32, %c0_i32_0 : i32, i32
  }
  func.func @transform_2(%arg0: i32) -> (i32, i32) {
    %c0_i32 = arith.constant 0 : i32
    %c0_i32_0 = arith.constant 0 : i32
    %c0_i32_1 = arith.constant 0 : i32
    return %c0_i32, %c0_i32_0 : i32, i32
  }
  func.func @transform_3(%arg0: i32) -> (i32, i32) {
    %c0_i32 = arith.constant 0 : i32
    %c0_i32_0 = arith.constant 0 : i32
    %c0_i32_1 = arith.constant 0 : i32
    return %c0_i32, %c0_i32_0 : i32, i32
  }
  func.func @transform_4(%arg0: i32) -> (i32, i32) {
    %c0_i32 = arith.constant 0 : i32
    %c0_i32_0 = arith.constant 0 : i32
    %c0_i32_1 = arith.constant 0 : i32
    return %c0_i32, %c0_i32_0 : i32, i32
  }
  func.func @transform_5(%arg0: i32) -> (i32, i32) {
    %c0_i32 = arith.constant 0 : i32
    %c0_i32_0 = arith.constant 0 : i32
    return %arg0, %c0_i32 : i32, i32
  }
}

</mosaic_0001>

<llo_original>
// kernel: agentnet_forward.1
$region0: #{agentnet_forward.1}
  #allocation0 [shape = 'u32[]', space=smem, size = 0x4, offset = 0x4, fixed_abs, tag = 'smem constant byte address 0x4 - core index']
  #allocation1 [shape = 'u32[144,128]{1,0:T(1,128)}', space=vmem, size = 0x12000, scoped, tag = 'internal scratch']
  %s0 = inlined_call_operand.vmem [shape: f32[16,16], index: 0, kind: input, shape index: {}]
  %s1 = inlined_call_operand.vmem [shape: bf16[16,32], index: 1, kind: input, shape index: {}]
  %s2 = inlined_call_operand.vmem [shape: f32[1,32], index: 2, kind: input, shape index: {}]
  %s3 = inlined_call_operand.vmem [shape: bf16[32,8], index: 3, kind: input, shape index: {}]
  %s4 = inlined_call_operand.vmem [shape: f32[1,8], index: 4, kind: input, shape index: {}]
  %s5 = inlined_call_operand.vmem [shape: f32[16,8], index: 5, kind: output, shape index: {}]
  %s6 = sld [smem:[#allocation0]]
  $region30: #{agentnet_forward.1} parent=0
    _
  %s8 = ssub.s32 1, %s6
  %s9 = scalar_select 0, %s8, %s6
  // Predicated region
  $region2: #{agentnet_forward.1} parent=0 // pred_check
    _
  $region3: #{agentnet_forward.1} parent=0 // pred_check_branch
    %11 = sbr.rel (0) target = $region5
  $region4: #{agentnet_forward.1} parent=0 // pred_region
    _
  $region5: #{agentnet_forward.1} parent=0 // pred_fallthru
    _
  // Predicated region
  $region6: #{agentnet_forward.1} parent=0 // pred_check
    _
  $region7: #{agentnet_forward.1} parent=0 // pred_check_branch
    %13 = sbr.rel (0) target = $region9
  $region8: #{agentnet_forward.1} parent=0 // pred_region
    _
  $region9: #{agentnet_forward.1} parent=0 // pred_fallthru
    _
  // Predicated region
  $region10: #{agentnet_forward.1} parent=0 // pred_check
    _
  $region11: #{agentnet_forward.1} parent=0 // pred_check_branch
    %15 = sbr.rel (0) target = $region13
  $region12: #{agentnet_forward.1} parent=0 // pred_region
    _
  $region13: #{agentnet_forward.1} parent=0 // pred_fallthru
    _
  // Predicated region
  $region14: #{agentnet_forward.1} parent=0 // pred_check
    _
  $region15: #{agentnet_forward.1} parent=0 // pred_check_branch
    %17 = sbr.rel (0) target = $region17
  $region16: #{agentnet_forward.1} parent=0 // pred_region
    _
  $region17: #{agentnet_forward.1} parent=0 // pred_fallthru
    _
  // Predicated region
  $region18: #{agentnet_forward.1} parent=0 // pred_check
    _
  $region19: #{agentnet_forward.1} parent=0 // pred_check_branch
    %19 = sbr.rel (0) target = $region21
  $region20: #{agentnet_forward.1} parent=0 // pred_region
    _
  $region21: #{agentnet_forward.1} parent=0 // pred_fallthru
    _
  %v21 = vld [vmem:[%s0] sm:$0xff]
  %v22 = vld [vmem:[%s0 + $0x8] sm:$0xff]
  %v23 = vpack.c.bf16 %v22, %v21
  %v24 = vld [vmem:[%s1] sm:$0xf]
  %v25 = vld [vmem:[%s1 + $0x4] sm:$0xf]
  %v26 = vld [vmem:[%s2] sm:$0x1]
  %v28 = vlaneseq
  %v29 = vshrl.u32 %v28, 7
  %v30 = vsub.s32 0, %v29
  %v31 = vrot.slane %v26, %v30
  %v35 = vunpack.c.l.b16 %v24
  %v36 = vunpack.c.l.b16 %v25
  %v37 = vpack.c.b16 %v36, %v35
  %vm39 = vcmask 130048
  %v41 = vsel %vm39, %v23, 0
  %43 = vmatprep.subr.bf16.mxu0 0
  %44 = vmatpush1.bf16.msra.mxu0 %v37
  %45 = vmatprep.subr.bf16.mxu0 0
  %46 = vmatpush1.bf16.msra.mxu0 0
  %47 = vmatprep.subr.bf16.mxu0 0
  %48 = vmatpush1.bf16.msra.mxu0 0
  %49 = vmatprep.subr.bf16.mxu0 0
  %50 = vmatpush1.bf16.msra.mxu0 0
  %51 = vmatprep.subr.bf16.mxu0 0
  %52 = vmatpush1.bf16.msra.mxu0 0
  %53 = vmatprep.subr.bf16.mxu0 0
  %54 = vmatpush1.bf16.msra.mxu0 0
  %55 = vmatprep.subr.bf16.mxu0 0
  %56 = vmatpush1.bf16.msra.mxu0 0
  %57 = vmatprep.subr.bf16.mxu0 0
  %58 = vmatpush1.bf16.msra.mxu0 0
  %59 = vmatprep.subr.bf16.mxu0 0
  %60 = vmatpush1.bf16.msra.mxu0 0
  %61 = vmatprep.subr.bf16.mxu0 0
  %62 = vmatpush1.bf16.msra.mxu0 0
  %63 = vmatprep.subr.bf16.mxu0 0
  %64 = vmatpush1.bf16.msra.mxu0 0
  %65 = vmatprep.subr.bf16.mxu0 0
  %66 = vmatpush1.bf16.msra.mxu0 0
  %67 = vmatprep.subr.bf16.mxu0 0
  %68 = vmatpush1.bf16.msra.mxu0 0
  %69 = vmatprep.subr.bf16.mxu0 0
  %70 = vmatpush1.bf16.msra.mxu0 0
  %71 = vmatprep.subr.bf16.mxu0 0
  %72 = vmatpush1.bf16.msra.mxu0 0
  %73 = vmatprep.subr.bf16.mxu0 0
  %74 = vmatpush1.bf16.msra.mxu0 0
  %75 = vmatprep.mubr.bf16.mxu0 0
  %76 = vmatmul.mubr.bf16.gmra.mrb[0].mxu0 %v41
  %v77 = vpop.f32.mrb[0].mxu0
  %v78 = vadd.f32 %v31, %v77
  %v79 = vpop.f32.mrb[0].mxu0
  %v80 = vpop.f32.mrb[0].mxu0
  %v81 = vadd.f32 %v31, %v80
  %v82 = vpop.f32.mrb[0].mxu0
  %83 = vdwg.mxu0
  %v84 = vmax.f32 %v78, 0.0
  %v85 = vmax.f32 %v81, 0.0
  %v86 = vpack.c.bf16 %v85, %v84
  %v87 = vld [vmem:[%s3] sm:$0xf]
  %v88 = vld [vmem:[%s3 + $0x4] sm:$0xf]
  %v89 = vld [vmem:[%s3 + $0x8] sm:$0xf]
  %v90 = vld [vmem:[%s3 + $0xc] sm:$0xf]
  %v91 = vld [vmem:[%s4] sm:$0x1]
  %v93 = vlaneseq
  %v94 = vshrl.u32 %v93, 7
  %v95 = vsub.s32 0, %v94
  %v96 = vrot.slane %v91, %v95
  %v102 = vunpack.c.l.b16 %v87
  %v103 = vunpack.c.l.b16 %v88
  %v104 = vunpack.c.l.b16 %v89
  %v105 = vunpack.c.l.b16 %v90
  %v106 = vpack.c.b16 %v103, %v102
  %v107 = vpack.c.b16 %v105, %v104
  %vm110 = vcmask 261120
  %v112 = vsel %vm110, %v86, 0
  %114 = vmatprep.subr.bf16.mxu0 0
  %115 = vmatpush1.bf16.msra.mxu0 %v106
  %116 = vmatprep.subr.bf16.mxu0 0
  %117 = vmatpush1.bf16.msra.mxu0 %v107
  %118 = vmatprep.subr.bf16.mxu0 0
  %119 = vmatpush1.bf16.msra.mxu0 0
  %120 = vmatprep.subr.bf16.mxu0 0
  %121 = vmatpush1.bf16.msra.mxu0 0
  %122 = vmatprep.subr.bf16.mxu0 0
  %123 = vmatpush1.bf16.msra.mxu0 0
  %124 = vmatprep.subr.bf16.mxu0 0
  %125 = vmatpush1.bf16.msra.mxu0 0
  %126 = vmatprep.subr.bf16.mxu0 0
  %127 = vmatpush1.bf16.msra.mxu0 0
  %128 = vmatprep.subr.bf16.mxu0 0
  %129 = vmatpush1.bf16.msra.mxu0 0
  %130 = vmatprep.subr.bf16.mxu0 0
  %131 = vmatpush1.bf16.msra.mxu0 0
  %132 = vmatprep.subr.bf16.mxu0 0
  %133 = vmatpush1.bf16.msra.mxu0 0
  %134 = vmatprep.subr.bf16.mxu0 0
  %135 = vmatpush1.bf16.msra.mxu0 0
  %136 = vmatprep.subr.bf16.mxu0 0
  %137 = vmatpush1.bf16.msra.mxu0 0
  %138 = vmatprep.subr.bf16.mxu0 0
  %139 = vmatpush1.bf16.msra.mxu0 0
  %140 = vmatprep.subr.bf16.mxu0 0
  %141 = vmatpush1.bf16.msra.mxu0 0
  %142 = vmatprep.subr.bf16.mxu0 0
  %143 = vmatpush1.bf16.msra.mxu0 0
  %144 = vmatprep.subr.bf16.mxu0 0
  %145 = vmatpush1.bf16.msra.mxu0 0
  %146 = vmatprep.mubr.bf16.mxu0 0
  %147 = vmatmul.mubr.bf16.gmra.mrb[0].mxu0 %v112
  %v148 = vpop.f32.mrb[0].mxu0
  %v149 = vadd.f32 %v96, %v148
  %v150 = vpop.f32.mrb[0].mxu0
  %v151 = vpop.f32.mrb[0].mxu0
  %v152 = vadd.f32 %v96, %v151
  %v153 = vpop.f32.mrb[0].mxu0
  %154 = vdwg.mxu0
  %vm155 = vcmask 64512
  %156 = vst.msk [vmem:[%s5] sm:$0xff] %vm155, %v149
  %157 = vst.msk [vmem:[%s5 + $0x8] sm:$0xff] %vm155, %v152
  // Predicated region
  $region22: #{agentnet_forward.1} parent=0 // pred_check
    _
  $region23: #{agentnet_forward.1} parent=0 // pred_check_branch
    %159 = sbr.rel (0) target = $region25
  $region24: #{agentnet_forward.1} parent=0 // pred_region
    _
  $region25: #{agentnet_forward.1} parent=0 // pred_fallthru
    _
  // Predicated region
  $region26: #{agentnet_forward.1} parent=0 // pred_check
    _
  $region27: #{agentnet_forward.1} parent=0 // pred_check_branch
    %161 = sbr.rel (0) target = $region29
  $region28: #{agentnet_forward.1} parent=0 // pred_region
    _
  $region29: #{agentnet_forward.1} parent=0 // pred_fallthru
    _

</llo_original>
